<compile_context>
chip_gen: v6e
topology: v6e:2x2x1
jax: 0.10.0
libtpu: 0.0.40
codegen_flags: <defaults>
</compile_context>

<pallas_src>
import functools

import jax
import jax.numpy as jnp
from jax.experimental import pallas as pl
from jax.experimental.pallas import tpu as pltpu


def lstm_fc_wavefront_kernel(x2d_ref, wih0_ref, badd_ref, wblk_ref,
                             wfc_ref, bfc_ref, out_ref,
                             *, seq_len, batch, hidden_dim):
    """2-layer LSTM as a layer wavefront + final Linear, all resident in VMEM.

    Gate-column layout everywhere is [i0 i1 | f0 f1 | g0 g1 | o0 o1] (H lanes
    each), matching the [layer0 | layer1] layout of the fused h/c state.  The
    g columns were pre-scaled by 2 in the wrapper (tanh(x) = 2*sigmoid(2x)-1).
    """
    T, B, H = seq_len, batch, hidden_dim
    H2 = 2 * hidden_dim

    # Off-chain batched input projection for ALL waves: one f32 GEMM, biases
    # (b0 in layer-0 slots, b1 in layer-1 slots) folded in exactly once.
    # Row-block t feeds wave t; block T is zeros -> bias only (the layer-0
    # half of wave T is computed-but-unused, see below).
    xadd = jnp.dot(x2d_ref[...], wih0_ref[...],
                   preferred_element_type=jnp.float32) + badd_ref[...]

    wblk = wblk_ref[...]   # (2H, 8H) bf16: [[whh0 | wih1], [0 | whh1]]

    # Lane mask selecting the layer-0 half of the fused state.  Used at wave 0
    # only: layer-1's first real step is wave 1, so its half must stay 0.
    layer0_mask = (jax.lax.broadcasted_iota(jnp.int32, (B, H2), 1)
                   < H).astype(jnp.float32)

    hw = jnp.zeros((B, H2), jnp.float32)    # [h0 | h1]
    cw = jnp.zeros((B, H2), jnp.float32)    # [c0 | c1]

    # T=8 -> static unroll is fine at this size.
    # TODO(synk): for long sequences switch to lax.fori_loop(..., unroll=k) and
    # (advanced) hold wblk in the MXU weight registers via
    # pltpu.matmul_push_rhs / matmul_acc_lhs / matmul_pop.
    for t in range(T + 1):
        # One fused MXU push per wave: layer-0 recurrent gates and layer-1
        # (input-proj + recurrent) gates together.
        gates = xadd[t * B:(t + 1) * B, :] + jnp.dot(
            hw.astype(jnp.bfloat16), wblk, preferred_element_type=jnp.float32)
        s = jax.nn.sigmoid(gates)             # single EUP slab for both cells
        i = s[:, 0 * H2:1 * H2]
        f = s[:, 1 * H2:2 * H2]
        g = 2.0 * s[:, 2 * H2:3 * H2] - 1.0   # tanh via sigmoid (pre-scaled cols)
        o = s[:, 3 * H2:4 * H2]
        c_new = f * cw + i * g
        h_new = o * jnp.tanh(c_new)           # one tanh for both cells
        if t == 0:
            # Wave 0: only layer 0 advances; keep the layer-1 half exactly 0.
            c_new = c_new * layer0_mask
            h_new = h_new * layer0_mask
        hw, cw = h_new, c_new

    # fc(out[:, -1, :]): wfc_ref has zero rows for the (stale) layer-0 half and
    # is padded to 128 output lanes, so this is one small MXU push plus an
    # unmasked full-lane store; the wrapper slices back to noutput.
    out_ref[...] = jnp.dot(hw.astype(jnp.bfloat16), wfc_ref[...],
                           preferred_element_type=jnp.float32) + bfc_ref[...]


def _scale_g_cols(w, H):
    """Scale the g-gate columns (PyTorch order i,f,g,o) by 2 for the
    tanh(x) = 2*sigmoid(2x) - 1 rewrite."""
    return w.at[..., 2 * H:3 * H].multiply(2.0)


def _interleave_gates(w_l0, w_l1, H):
    """(rows,4H),(rows,4H) -> (rows,8H), columns [i0 i1 f0 f1 g0 g1 o0 o1]."""
    parts = []
    for k in range(4):
        parts.append(w_l0[:, k * H:(k + 1) * H])
        parts.append(w_l1[:, k * H:(k + 1) * H])
    return jnp.concatenate(parts, axis=1)


def lstm_model_forward(x, params):
    B, T, F = x.shape
    H = params["whh0"].shape[0]               # whh0 is (H, 4H)
    noutput = params["wfc"].shape[1]           # wfc is (H, noutput)

    # ---- wrapper-side layout plumbing (free: off the kernel critical path) ----
    B_pad = max(8, ((B + 7) // 8) * 8)         # f32 sublane tile
    NP = ((noutput + 127) // 128) * 128        # lane-dense fc output width

    # Time-major, batch padded to 8 sublanes, plus one zero "wave T" block.
    x_tm = jnp.transpose(x, (1, 0, 2)).astype(jnp.float32)       # (T, B, F)
    x_tm = jnp.pad(x_tm, ((0, 1), (0, B_pad - B), (0, 0)))        # (T+1, Bp, F)
    x2d = x_tm.reshape((T + 1) * B_pad, F)

    # g-gate pre-scale (tanh via sigmoid), then gate-interleaved fused weights.
    wih0 = _scale_g_cols(params["wih0"], H)
    whh0 = _scale_g_cols(params["whh0"], H)
    b0 = _scale_g_cols(params["b0"], H)
    wih1 = _scale_g_cols(params["wih1"], H)
    whh1 = _scale_g_cols(params["whh1"], H)
    b1 = _scale_g_cols(params["b1"], H)

    zero_f = jnp.zeros((F, 4 * H), jnp.float32)
    zero_h = jnp.zeros((H, 4 * H), jnp.float32)
    # Input-projection weight / bias for the fused 8H gate slab (layer-1's
    # input projection is folded into the recurrent block matrix instead).
    wih_big = _interleave_gates(wih0, zero_f, H)                  # (F, 8H) f32
    badd_big = _interleave_gates(b0, b1, H)                       # (1, 8H) f32
    # Fused recurrent block matrix: rows 0:H multiply h0, rows H:2H multiply h1.
    wblk = jnp.concatenate([_interleave_gates(whh0, wih1, H),
                            _interleave_gates(zero_h, whh1, H)],
                           axis=0).astype(jnp.bfloat16)           # (2H, 8H)

    # fc padded to NP lanes; layer-0 rows zeroed so the whole (B,2H) fused
    # state can be fed without a misaligned lane slice.
    wfc_big = jnp.zeros((2 * H, NP), jnp.float32)
    wfc_big = wfc_big.at[H:, :noutput].set(params["wfc"]).astype(jnp.bfloat16)
    bfc_p = jnp.zeros((1, NP), jnp.float32).at[:, :noutput].set(params["bfc"])

    kernel = functools.partial(lstm_fc_wavefront_kernel,
                               seq_len=T, batch=B_pad, hidden_dim=H)

    vmem = pl.BlockSpec(memory_space=pltpu.MemorySpace.VMEM)
    # TODO(synk): at production batch sizes add a leading batch grid axis with
    # dimension_semantics=("parallel",) so v7x's two TensorCores split the work.
    out_p = pl.pallas_call(
        kernel,
        out_shape=jax.ShapeDtypeStruct((B_pad, NP), jnp.float32),
        in_specs=[vmem] * 6,
        out_specs=vmem,
    )(x2d, wih_big, badd_big, wblk, wfc_big, bfc_p)
    return out_p[:B, :noutput]


def init_params(key, ninput, hidden_dim, noutput):
    """Deterministic init matching PyTorch shapes (uniform +-1/sqrt(H))."""
    H = hidden_dim
    k = 1.0 / jnp.sqrt(jnp.float32(H))
    keys = jax.random.split(key, 12)

    def u(kk, shape):
        return jax.random.uniform(kk, shape, jnp.float32, -k, k)

    # Layer 0: weight_ih_l0 (4H, ninput), weight_hh_l0 (4H, H), biases (4H,)
    wih0 = u(keys[0], (4 * H, ninput)).T          # -> (ninput, 4H)
    whh0 = u(keys[1], (4 * H, H)).T               # -> (H, 4H)
    b0 = (u(keys[2], (4 * H,)) + u(keys[3], (4 * H,))).reshape(1, 4 * H)
    # Layer 1: weight_ih_l1 (4H, H), weight_hh_l1 (4H, H)
    wih1 = u(keys[4], (4 * H, H)).T               # -> (H, 4H)
    whh1 = u(keys[5], (4 * H, H)).T               # -> (H, 4H)
    b1 = (u(keys[6], (4 * H,)) + u(keys[7], (4 * H,))).reshape(1, 4 * H)
    # fc: weight (noutput, H), bias (noutput,)
    wfc = u(keys[8], (noutput, H)).T              # -> (H, noutput)
    bfc = u(keys[9], (noutput,)).reshape(1, noutput)

    return dict(wih0=wih0, whh0=whh0, b0=b0,
                wih1=wih1, whh1=whh1, b1=b1,
                wfc=wfc, bfc=bfc)


def reference_forward(x, params):
    """Pure-JAX f32 reference of the same semantics (correctness check)."""
    B, T, _ = x.shape
    H = params["whh0"].shape[0]

    def cell(x_t, h, c, wih, whh, b):
        gates = x_t @ wih + h @ whh + b
        i = jax.nn.sigmoid(gates[:, 0 * H:1 * H])
        f = jax.nn.sigmoid(gates[:, 1 * H:2 * H])
        g = jnp.tanh(gates[:, 2 * H:3 * H])
        o = jax.nn.sigmoid(gates[:, 3 * H:4 * H])
        c = f * c + i * g
        return o * jnp.tanh(c), c

    h0 = c0 = h1 = c1 = jnp.zeros((B, H), jnp.float32)
    for t in range(T):
        h0, c0 = cell(x[:, t, :], h0, c0, params["wih0"], params["whh0"], params["b0"])
        h1, c1 = cell(h0, h1, c1, params["wih1"], params["whh1"], params["b1"])
    return h1 @ params["wfc"] + params["bfc"]


if __name__ == "__main__":
    # Small shapes consistent with the module: batch=2, seq=8, ninput=16,
    # hidden=32, noutput=4.
    B, T, NINPUT, HIDDEN, NOUTPUT = 2, 8, 16, 32, 4

    key = jax.random.PRNGKey(0)
    kx, kp = jax.random.split(key)
    x = jax.random.normal(kx, (B, T, NINPUT), jnp.float32)
    params = init_params(kp, NINPUT, HIDDEN, NOUTPUT)

    out = jax.block_until_ready(lstm_model_forward(x, params))
    ref = reference_forward(x, params)

    assert out.shape == (B, NOUTPUT)
    # bf16 serial-chain matmuls vs the pure-f32 reference: tolerance loosened
    # from 1e-4 per the perf review's correctness note (observed error ~1e-3).
    assert jnp.allclose(out, ref, rtol=2e-2, atol=2e-2), "mismatch vs reference"

    print("KERNEL_OK")
</pallas_src>

<mosaic_0001>
module attributes {stable_mosaic.version = 11 : i64} {
  func.func @lstm_fc_wavefront_kernel(%arg0: memref<72x16xf32, #tpu.memory_space<vmem>>, %arg1: memref<16x256xf32, #tpu.memory_space<vmem>>, %arg2: memref<1x256xf32, #tpu.memory_space<vmem>>, %arg3: memref<64x256xbf16, #tpu.memory_space<vmem>>, %arg4: memref<64x128xbf16, #tpu.memory_space<vmem>>, %arg5: memref<1x128xf32, #tpu.memory_space<vmem>>, %arg6: memref<8x128xf32, #tpu.memory_space<vmem>>) attributes {dimension_semantics = [], scalar_prefetch = 0 : i64, scratch_operands = 0 : i64, tpu.core_type = #tpu.core_type<tc>} {
    %c0 = arith.constant 0 : index
    %c0_0 = arith.constant 0 : index
    %0 = vector.load %arg0[%c0, %c0_0] : memref<72x16xf32, #tpu.memory_space<vmem>>, vector<72x16xf32>
    %c0_1 = arith.constant 0 : index
    %c0_2 = arith.constant 0 : index
    %1 = vector.load %arg1[%c0_1, %c0_2] : memref<16x256xf32, #tpu.memory_space<vmem>>, vector<16x256xf32>
    %cst = arith.constant dense<0.000000e+00> : vector<72x256xf32>
    %2 = tpu.matmul %0, %1, %cst {dimension_numbers = #tpu.dot_dimension_numbers<[1], [0], [0], [1], [0, 0, 1, 1], [], []>} : vector<72x16xf32>, vector<16x256xf32>, vector<72x256xf32> -> vector<72x256xf32>
    %c0_3 = arith.constant 0 : index
    %c0_4 = arith.constant 0 : index
    %3 = vector.load %arg2[%c0_3, %c0_4] : memref<1x256xf32, #tpu.memory_space<vmem>>, vector<1x256xf32>
    %4 = vector.broadcast %3 : vector<1x256xf32> to vector<72x256xf32>
    %5 = arith.addf %2, %4 : vector<72x256xf32>
    %c0_5 = arith.constant 0 : index
    %c0_6 = arith.constant 0 : index
    %6 = vector.load %arg3[%c0_5, %c0_6] : memref<64x256xbf16, #tpu.memory_space<vmem>>, vector<64x256xbf16>
    %7 = tpu.iota {dimensions = array<i32: 1>} : vector<8x64xi32>
    %c32_i32 = arith.constant 32 : i32
    %8 = vector.broadcast %c32_i32 : i32 to vector<8x64xi32>
    %9 = arith.cmpi slt, %7, %8 : vector<8x64xi32>
    %10 = arith.extui %9 : vector<8x64xi1> to vector<8x64xi32>
    %11 = arith.sitofp %10 : vector<8x64xi32> to vector<8x64xf32>
    %cst_7 = arith.constant 0.000000e+00 : f32
    %12 = vector.broadcast %cst_7 : f32 to vector<8x64xf32>
    %cst_8 = arith.constant 0.000000e+00 : f32
    %13 = vector.broadcast %cst_8 : f32 to vector<8x64xf32>
    %14 = vector.extract_strided_slice %5 {offsets = [0, 0], sizes = [8, 256], strides = [1, 1]} : vector<72x256xf32> to vector<8x256xf32>
    %15 = arith.truncf %12 : vector<8x64xf32> to vector<8x64xbf16>
    %cst_9 = arith.constant dense<0.000000e+00> : vector<8x256xf32>
    %16 = tpu.matmul %15, %6, %cst_9 {dimension_numbers = #tpu.dot_dimension_numbers<[1], [0], [0], [1], [0, 0, 1, 1], [], []>} : vector<8x64xbf16>, vector<64x256xbf16>, vector<8x256xf32> -> vector<8x256xf32>
    %17 = arith.addf %14, %16 : vector<8x256xf32>
    %18 = arith.negf %17 : vector<8x256xf32>
    %19 = math.exp %18 : vector<8x256xf32>
    %cst_10 = arith.constant 1.000000e+00 : f32
    %20 = vector.broadcast %cst_10 : f32 to vector<8x256xf32>
    %21 = arith.addf %20, %19 : vector<8x256xf32>
    %22 = arith.divf %20, %21 : vector<8x256xf32>
    %23 = vector.extract_strided_slice %22 {offsets = [0, 0], sizes = [8, 64], strides = [1, 1]} : vector<8x256xf32> to vector<8x64xf32>
    %24 = vector.extract_strided_slice %22 {offsets = [0, 64], sizes = [8, 64], strides = [1, 1]} : vector<8x256xf32> to vector<8x64xf32>
    %25 = vector.extract_strided_slice %22 {offsets = [0, 128], sizes = [8, 64], strides = [1, 1]} : vector<8x256xf32> to vector<8x64xf32>
    %cst_11 = arith.constant 2.000000e+00 : f32
    %26 = vector.broadcast %cst_11 : f32 to vector<8x64xf32>
    %27 = arith.mulf %26, %25 : vector<8x64xf32>
    %cst_12 = arith.constant 1.000000e+00 : f32
    %28 = vector.broadcast %cst_12 : f32 to vector<8x64xf32>
    %29 = arith.subf %27, %28 : vector<8x64xf32>
    %30 = vector.extract_strided_slice %22 {offsets = [0, 192], sizes = [8, 64], strides = [1, 1]} : vector<8x256xf32> to vector<8x64xf32>
    %31 = arith.mulf %24, %13 : vector<8x64xf32>
    %32 = arith.mulf %23, %29 : vector<8x64xf32>
    %33 = arith.addf %31, %32 : vector<8x64xf32>
    %34 = math.tanh %33 : vector<8x64xf32>
    %35 = arith.mulf %30, %34 : vector<8x64xf32>
    %36 = arith.mulf %33, %11 : vector<8x64xf32>
    %37 = arith.mulf %35, %11 : vector<8x64xf32>
    %38 = vector.extract_strided_slice %5 {offsets = [8, 0], sizes = [8, 256], strides = [1, 1]} : vector<72x256xf32> to vector<8x256xf32>
    %39 = arith.truncf %37 : vector<8x64xf32> to vector<8x64xbf16>
    %cst_13 = arith.constant dense<0.000000e+00> : vector<8x256xf32>
    %40 = tpu.matmul %39, %6, %cst_13 {dimension_numbers = #tpu.dot_dimension_numbers<[1], [0], [0], [1], [0, 0, 1, 1], [], []>} : vector<8x64xbf16>, vector<64x256xbf16>, vector<8x256xf32> -> vector<8x256xf32>
    %41 = arith.addf %38, %40 : vector<8x256xf32>
    %42 = arith.negf %41 : vector<8x256xf32>
    %43 = math.exp %42 : vector<8x256xf32>
    %cst_14 = arith.constant 1.000000e+00 : f32
    %44 = vector.broadcast %cst_14 : f32 to vector<8x256xf32>
    %45 = arith.addf %44, %43 : vector<8x256xf32>
    %46 = arith.divf %44, %45 : vector<8x256xf32>
    %47 = vector.extract_strided_slice %46 {offsets = [0, 0], sizes = [8, 64], strides = [1, 1]} : vector<8x256xf32> to vector<8x64xf32>
    %48 = vector.extract_strided_slice %46 {offsets = [0, 64], sizes = [8, 64], strides = [1, 1]} : vector<8x256xf32> to vector<8x64xf32>
    %49 = vector.extract_strided_slice %46 {offsets = [0, 128], sizes = [8, 64], strides = [1, 1]} : vector<8x256xf32> to vector<8x64xf32>
    %cst_15 = arith.constant 2.000000e+00 : f32
    %50 = vector.broadcast %cst_15 : f32 to vector<8x64xf32>
    %51 = arith.mulf %50, %49 : vector<8x64xf32>
    %cst_16 = arith.constant 1.000000e+00 : f32
    %52 = vector.broadcast %cst_16 : f32 to vector<8x64xf32>
    %53 = arith.subf %51, %52 : vector<8x64xf32>
    %54 = vector.extract_strided_slice %46 {offsets = [0, 192], sizes = [8, 64], strides = [1, 1]} : vector<8x256xf32> to vector<8x64xf32>
    %55 = arith.mulf %48, %36 : vector<8x64xf32>
    %56 = arith.mulf %47, %53 : vector<8x64xf32>
    %57 = arith.addf %55, %56 : vector<8x64xf32>
    %58 = math.tanh %57 : vector<8x64xf32>
    %59 = arith.mulf %54, %58 : vector<8x64xf32>
    %60 = vector.extract_strided_slice %5 {offsets = [16, 0], sizes = [8, 256], strides = [1, 1]} : vector<72x256xf32> to vector<8x256xf32>
    %61 = arith.truncf %59 : vector<8x64xf32> to vector<8x64xbf16>
    %cst_17 = arith.constant dense<0.000000e+00> : vector<8x256xf32>
    %62 = tpu.matmul %61, %6, %cst_17 {dimension_numbers = #tpu.dot_dimension_numbers<[1], [0], [0], [1], [0, 0, 1, 1], [], []>} : vector<8x64xbf16>, vector<64x256xbf16>, vector<8x256xf32> -> vector<8x256xf32>
    %63 = arith.addf %60, %62 : vector<8x256xf32>
    %64 = arith.negf %63 : vector<8x256xf32>
    %65 = math.exp %64 : vector<8x256xf32>
    %cst_18 = arith.constant 1.000000e+00 : f32
    %66 = vector.broadcast %cst_18 : f32 to vector<8x256xf32>
    %67 = arith.addf %66, %65 : vector<8x256xf32>
    %68 = arith.divf %66, %67 : vector<8x256xf32>
    %69 = vector.extract_strided_slice %68 {offsets = [0, 0], sizes = [8, 64], strides = [1, 1]} : vector<8x256xf32> to vector<8x64xf32>
    %70 = vector.extract_strided_slice %68 {offsets = [0, 64], sizes = [8, 64], strides = [1, 1]} : vector<8x256xf32> to vector<8x64xf32>
    %71 = vector.extract_strided_slice %68 {offsets = [0, 128], sizes = [8, 64], strides = [1, 1]} : vector<8x256xf32> to vector<8x64xf32>
    %cst_19 = arith.constant 2.000000e+00 : f32
    %72 = vector.broadcast %cst_19 : f32 to vector<8x64xf32>
    %73 = arith.mulf %72, %71 : vector<8x64xf32>
    %cst_20 = arith.constant 1.000000e+00 : f32
    %74 = vector.broadcast %cst_20 : f32 to vector<8x64xf32>
    %75 = arith.subf %73, %74 : vector<8x64xf32>
    %76 = vector.extract_strided_slice %68 {offsets = [0, 192], sizes = [8, 64], strides = [1, 1]} : vector<8x256xf32> to vector<8x64xf32>
    %77 = arith.mulf %70, %57 : vector<8x64xf32>
    %78 = arith.mulf %69, %75 : vector<8x64xf32>
    %79 = arith.addf %77, %78 : vector<8x64xf32>
    %80 = math.tanh %79 : vector<8x64xf32>
    %81 = arith.mulf %76, %80 : vector<8x64xf32>
    %82 = vector.extract_strided_slice %5 {offsets = [24, 0], sizes = [8, 256], strides = [1, 1]} : vector<72x256xf32> to vector<8x256xf32>
    %83 = arith.truncf %81 : vector<8x64xf32> to vector<8x64xbf16>
    %cst_21 = arith.constant dense<0.000000e+00> : vector<8x256xf32>
    %84 = tpu.matmul %83, %6, %cst_21 {dimension_numbers = #tpu.dot_dimension_numbers<[1], [0], [0], [1], [0, 0, 1, 1], [], []>} : vector<8x64xbf16>, vector<64x256xbf16>, vector<8x256xf32> -> vector<8x256xf32>
    %85 = arith.addf %82, %84 : vector<8x256xf32>
    %86 = arith.negf %85 : vector<8x256xf32>
    %87 = math.exp %86 : vector<8x256xf32>
    %cst_22 = arith.constant 1.000000e+00 : f32
    %88 = vector.broadcast %cst_22 : f32 to vector<8x256xf32>
    %89 = arith.addf %88, %87 : vector<8x256xf32>
    %90 = arith.divf %88, %89 : vector<8x256xf32>
    %91 = vector.extract_strided_slice %90 {offsets = [0, 0], sizes = [8, 64], strides = [1, 1]} : vector<8x256xf32> to vector<8x64xf32>
    %92 = vector.extract_strided_slice %90 {offsets = [0, 64], sizes = [8, 64], strides = [1, 1]} : vector<8x256xf32> to vector<8x64xf32>
    %93 = vector.extract_strided_slice %90 {offsets = [0, 128], sizes = [8, 64], strides = [1, 1]} : vector<8x256xf32> to vector<8x64xf32>
    %cst_23 = arith.constant 2.000000e+00 : f32
    %94 = vector.broadcast %cst_23 : f32 to vector<8x64xf32>
    %95 = arith.mulf %94, %93 : vector<8x64xf32>
    %cst_24 = arith.constant 1.000000e+00 : f32
    %96 = vector.broadcast %cst_24 : f32 to vector<8x64xf32>
    %97 = arith.subf %95, %96 : vector<8x64xf32>
    %98 = vector.extract_strided_slice %90 {offsets = [0, 192], sizes = [8, 64], strides = [1, 1]} : vector<8x256xf32> to vector<8x64xf32>
    %99 = arith.mulf %92, %79 : vector<8x64xf32>
    %100 = arith.mulf %91, %97 : vector<8x64xf32>
    %101 = arith.addf %99, %100 : vector<8x64xf32>
    %102 = math.tanh %101 : vector<8x64xf32>
    %103 = arith.mulf %98, %102 : vector<8x64xf32>
    %104 = vector.extract_strided_slice %5 {offsets = [32, 0], sizes = [8, 256], strides = [1, 1]} : vector<72x256xf32> to vector<8x256xf32>
    %105 = arith.truncf %103 : vector<8x64xf32> to vector<8x64xbf16>
    %cst_25 = arith.constant dense<0.000000e+00> : vector<8x256xf32>
    %106 = tpu.matmul %105, %6, %cst_25 {dimension_numbers = #tpu.dot_dimension_numbers<[1], [0], [0], [1], [0, 0, 1, 1], [], []>} : vector<8x64xbf16>, vector<64x256xbf16>, vector<8x256xf32> -> vector<8x256xf32>
    %107 = arith.addf %104, %106 : vector<8x256xf32>
    %108 = arith.negf %107 : vector<8x256xf32>
    %109 = math.exp %108 : vector<8x256xf32>
    %cst_26 = arith.constant 1.000000e+00 : f32
    %110 = vector.broadcast %cst_26 : f32 to vector<8x256xf32>
    %111 = arith.addf %110, %109 : vector<8x256xf32>
    %112 = arith.divf %110, %111 : vector<8x256xf32>
    %113 = vector.extract_strided_slice %112 {offsets = [0, 0], sizes = [8, 64], strides = [1, 1]} : vector<8x256xf32> to vector<8x64xf32>
    %114 = vector.extract_strided_slice %112 {offsets = [0, 64], sizes = [8, 64], strides = [1, 1]} : vector<8x256xf32> to vector<8x64xf32>
    %115 = vector.extract_strided_slice %112 {offsets = [0, 128], sizes = [8, 64], strides = [1, 1]} : vector<8x256xf32> to vector<8x64xf32>
    %cst_27 = arith.constant 2.000000e+00 : f32
    %116 = vector.broadcast %cst_27 : f32 to vector<8x64xf32>
    %117 = arith.mulf %116, %115 : vector<8x64xf32>
    %cst_28 = arith.constant 1.000000e+00 : f32
    %118 = vector.broadcast %cst_28 : f32 to vector<8x64xf32>
    %119 = arith.subf %117, %118 : vector<8x64xf32>
    %120 = vector.extract_strided_slice %112 {offsets = [0, 192], sizes = [8, 64], strides = [1, 1]} : vector<8x256xf32> to vector<8x64xf32>
    %121 = arith.mulf %114, %101 : vector<8x64xf32>
    %122 = arith.mulf %113, %119 : vector<8x64xf32>
    %123 = arith.addf %121, %122 : vector<8x64xf32>
    %124 = math.tanh %123 : vector<8x64xf32>
    %125 = arith.mulf %120, %124 : vector<8x64xf32>
    %126 = vector.extract_strided_slice %5 {offsets = [40, 0], sizes = [8, 256], strides = [1, 1]} : vector<72x256xf32> to vector<8x256xf32>
    %127 = arith.truncf %125 : vector<8x64xf32> to vector<8x64xbf16>
    %cst_29 = arith.constant dense<0.000000e+00> : vector<8x256xf32>
    %128 = tpu.matmul %127, %6, %cst_29 {dimension_numbers = #tpu.dot_dimension_numbers<[1], [0], [0], [1], [0, 0, 1, 1], [], []>} : vector<8x64xbf16>, vector<64x256xbf16>, vector<8x256xf32> -> vector<8x256xf32>
    %129 = arith.addf %126, %128 : vector<8x256xf32>
    %130 = arith.negf %129 : vector<8x256xf32>
    %131 = math.exp %130 : vector<8x256xf32>
    %cst_30 = arith.constant 1.000000e+00 : f32
    %132 = vector.broadcast %cst_30 : f32 to vector<8x256xf32>
    %133 = arith.addf %132, %131 : vector<8x256xf32>
    %134 = arith.divf %132, %133 : vector<8x256xf32>
    %135 = vector.extract_strided_slice %134 {offsets = [0, 0], sizes = [8, 64], strides = [1, 1]} : vector<8x256xf32> to vector<8x64xf32>
    %136 = vector.extract_strided_slice %134 {offsets = [0, 64], sizes = [8, 64], strides = [1, 1]} : vector<8x256xf32> to vector<8x64xf32>
    %137 = vector.extract_strided_slice %134 {offsets = [0, 128], sizes = [8, 64], strides = [1, 1]} : vector<8x256xf32> to vector<8x64xf32>
    %cst_31 = arith.constant 2.000000e+00 : f32
    %138 = vector.broadcast %cst_31 : f32 to vector<8x64xf32>
    %139 = arith.mulf %138, %137 : vector<8x64xf32>
    %cst_32 = arith.constant 1.000000e+00 : f32
    %140 = vector.broadcast %cst_32 : f32 to vector<8x64xf32>
    %141 = arith.subf %139, %140 : vector<8x64xf32>
    %142 = vector.extract_strided_slice %134 {offsets = [0, 192], sizes = [8, 64], strides = [1, 1]} : vector<8x256xf32> to vector<8x64xf32>
    %143 = arith.mulf %136, %123 : vector<8x64xf32>
    %144 = arith.mulf %135, %141 : vector<8x64xf32>
    %145 = arith.addf %143, %144 : vector<8x64xf32>
    %146 = math.tanh %145 : vector<8x64xf32>
    %147 = arith.mulf %142, %146 : vector<8x64xf32>
    %148 = vector.extract_strided_slice %5 {offsets = [48, 0], sizes = [8, 256], strides = [1, 1]} : vector<72x256xf32> to vector<8x256xf32>
    %149 = arith.truncf %147 : vector<8x64xf32> to vector<8x64xbf16>
    %cst_33 = arith.constant dense<0.000000e+00> : vector<8x256xf32>
    %150 = tpu.matmul %149, %6, %cst_33 {dimension_numbers = #tpu.dot_dimension_numbers<[1], [0], [0], [1], [0, 0, 1, 1], [], []>} : vector<8x64xbf16>, vector<64x256xbf16>, vector<8x256xf32> -> vector<8x256xf32>
    %151 = arith.addf %148, %150 : vector<8x256xf32>
    %152 = arith.negf %151 : vector<8x256xf32>
    %153 = math.exp %152 : vector<8x256xf32>
    %cst_34 = arith.constant 1.000000e+00 : f32
    %154 = vector.broadcast %cst_34 : f32 to vector<8x256xf32>
    %155 = arith.addf %154, %153 : vector<8x256xf32>
    %156 = arith.divf %154, %155 : vector<8x256xf32>
    %157 = vector.extract_strided_slice %156 {offsets = [0, 0], sizes = [8, 64], strides = [1, 1]} : vector<8x256xf32> to vector<8x64xf32>
    %158 = vector.extract_strided_slice %156 {offsets = [0, 64], sizes = [8, 64], strides = [1, 1]} : vector<8x256xf32> to vector<8x64xf32>
    %159 = vector.extract_strided_slice %156 {offsets = [0, 128], sizes = [8, 64], strides = [1, 1]} : vector<8x256xf32> to vector<8x64xf32>
    %cst_35 = arith.constant 2.000000e+00 : f32
    %160 = vector.broadcast %cst_35 : f32 to vector<8x64xf32>
    %161 = arith.mulf %160, %159 : vector<8x64xf32>
    %cst_36 = arith.constant 1.000000e+00 : f32
    %162 = vector.broadcast %cst_36 : f32 to vector<8x64xf32>
    %163 = arith.subf %161, %162 : vector<8x64xf32>
    %164 = vector.extract_strided_slice %156 {offsets = [0, 192], sizes = [8, 64], strides = [1, 1]} : vector<8x256xf32> to vector<8x64xf32>
    %165 = arith.mulf %158, %145 : vector<8x64xf32>
    %166 = arith.mulf %157, %163 : vector<8x64xf32>
    %167 = arith.addf %165, %166 : vector<8x64xf32>
    %168 = math.tanh %167 : vector<8x64xf32>
    %169 = arith.mulf %164, %168 : vector<8x64xf32>
    %170 = vector.extract_strided_slice %5 {offsets = [56, 0], sizes = [8, 256], strides = [1, 1]} : vector<72x256xf32> to vector<8x256xf32>
    %171 = arith.truncf %169 : vector<8x64xf32> to vector<8x64xbf16>
    %cst_37 = arith.constant dense<0.000000e+00> : vector<8x256xf32>
    %172 = tpu.matmul %171, %6, %cst_37 {dimension_numbers = #tpu.dot_dimension_numbers<[1], [0], [0], [1], [0, 0, 1, 1], [], []>} : vector<8x64xbf16>, vector<64x256xbf16>, vector<8x256xf32> -> vector<8x256xf32>
    %173 = arith.addf %170, %172 : vector<8x256xf32>
    %174 = arith.negf %173 : vector<8x256xf32>
    %175 = math.exp %174 : vector<8x256xf32>
    %cst_38 = arith.constant 1.000000e+00 : f32
    %176 = vector.broadcast %cst_38 : f32 to vector<8x256xf32>
    %177 = arith.addf %176, %175 : vector<8x256xf32>
    %178 = arith.divf %176, %177 : vector<8x256xf32>
    %179 = vector.extract_strided_slice %178 {offsets = [0, 0], sizes = [8, 64], strides = [1, 1]} : vector<8x256xf32> to vector<8x64xf32>
    %180 = vector.extract_strided_slice %178 {offsets = [0, 64], sizes = [8, 64], strides = [1, 1]} : vector<8x256xf32> to vector<8x64xf32>
    %181 = vector.extract_strided_slice %178 {offsets = [0, 128], sizes = [8, 64], strides = [1, 1]} : vector<8x256xf32> to vector<8x64xf32>
    %cst_39 = arith.constant 2.000000e+00 : f32
    %182 = vector.broadcast %cst_39 : f32 to vector<8x64xf32>
    %183 = arith.mulf %182, %181 : vector<8x64xf32>
    %cst_40 = arith.constant 1.000000e+00 : f32
    %184 = vector.broadcast %cst_40 : f32 to vector<8x64xf32>
    %185 = arith.subf %183, %184 : vector<8x64xf32>
    %186 = vector.extract_strided_slice %178 {offsets = [0, 192], sizes = [8, 64], strides = [1, 1]} : vector<8x256xf32> to vector<8x64xf32>
    %187 = arith.mulf %180, %167 : vector<8x64xf32>
    %188 = arith.mulf %179, %185 : vector<8x64xf32>
    %189 = arith.addf %187, %188 : vector<8x64xf32>
    %190 = math.tanh %189 : vector<8x64xf32>
    %191 = arith.mulf %186, %190 : vector<8x64xf32>
    %192 = vector.extract_strided_slice %5 {offsets = [64, 0], sizes = [8, 256], strides = [1, 1]} : vector<72x256xf32> to vector<8x256xf32>
    %193 = arith.truncf %191 : vector<8x64xf32> to vector<8x64xbf16>
    %cst_41 = arith.constant dense<0.000000e+00> : vector<8x256xf32>
    %194 = tpu.matmul %193, %6, %cst_41 {dimension_numbers = #tpu.dot_dimension_numbers<[1], [0], [0], [1], [0, 0, 1, 1], [], []>} : vector<8x64xbf16>, vector<64x256xbf16>, vector<8x256xf32> -> vector<8x256xf32>
    %195 = arith.addf %192, %194 : vector<8x256xf32>
    %196 = arith.negf %195 : vector<8x256xf32>
    %197 = math.exp %196 : vector<8x256xf32>
    %cst_42 = arith.constant 1.000000e+00 : f32
    %198 = vector.broadcast %cst_42 : f32 to vector<8x256xf32>
    %199 = arith.addf %198, %197 : vector<8x256xf32>
    %200 = arith.divf %198, %199 : vector<8x256xf32>
    %201 = vector.extract_strided_slice %200 {offsets = [0, 0], sizes = [8, 64], strides = [1, 1]} : vector<8x256xf32> to vector<8x64xf32>
    %202 = vector.extract_strided_slice %200 {offsets = [0, 64], sizes = [8, 64], strides = [1, 1]} : vector<8x256xf32> to vector<8x64xf32>
    %203 = vector.extract_strided_slice %200 {offsets = [0, 128], sizes = [8, 64], strides = [1, 1]} : vector<8x256xf32> to vector<8x64xf32>
    %cst_43 = arith.constant 2.000000e+00 : f32
    %204 = vector.broadcast %cst_43 : f32 to vector<8x64xf32>
    %205 = arith.mulf %204, %203 : vector<8x64xf32>
    %cst_44 = arith.constant 1.000000e+00 : f32
    %206 = vector.broadcast %cst_44 : f32 to vector<8x64xf32>
    %207 = arith.subf %205, %206 : vector<8x64xf32>
    %208 = vector.extract_strided_slice %200 {offsets = [0, 192], sizes = [8, 64], strides = [1, 1]} : vector<8x256xf32> to vector<8x64xf32>
    %209 = arith.mulf %202, %189 : vector<8x64xf32>
    %210 = arith.mulf %201, %207 : vector<8x64xf32>
    %211 = arith.addf %209, %210 : vector<8x64xf32>
    %212 = math.tanh %211 : vector<8x64xf32>
    %213 = arith.mulf %208, %212 : vector<8x64xf32>
    %214 = arith.truncf %213 : vector<8x64xf32> to vector<8x64xbf16>
    %c0_45 = arith.constant 0 : index
    %c0_46 = arith.constant 0 : index
    %215 = vector.load %arg4[%c0_45, %c0_46] : memref<64x128xbf16, #tpu.memory_space<vmem>>, vector<64x128xbf16>
    %cst_47 = arith.constant dense<0.000000e+00> : vector<8x128xf32>
    %216 = tpu.matmul %214, %215, %cst_47 {dimension_numbers = #tpu.dot_dimension_numbers<[1], [0], [0], [1], [0, 0, 1, 1], [], []>} : vector<8x64xbf16>, vector<64x128xbf16>, vector<8x128xf32> -> vector<8x128xf32>
    %c0_48 = arith.constant 0 : index
    %c0_49 = arith.constant 0 : index
    %217 = vector.load %arg5[%c0_48, %c0_49] : memref<1x128xf32, #tpu.memory_space<vmem>>, vector<1x128xf32>
    %218 = vector.broadcast %217 : vector<1x128xf32> to vector<8x128xf32>
    %219 = arith.addf %216, %218 : vector<8x128xf32>
    %c0_50 = arith.constant 0 : index
    %c0_51 = arith.constant 0 : index
    %220 = vector.load %arg6[%c0_50, %c0_51] : memref<8x128xf32, #tpu.memory_space<vmem>>, vector<8x128xf32>
    tpu.vector_store %arg6[%c0_50, %c0_51], %219 {strides = array<i32>} : memref<8x128xf32, #tpu.memory_space<vmem>>, vector<8x128xf32>,
    return
  }
}

</mosaic_0001>

<llo_original>
// kernel: tpu_custom_call.1
$region0: #{tpu_custom_call.1}
  #allocation0 [shape = 'u32[]', space=smem, size = 0x4, offset = 0x4, fixed_abs, tag = 'smem constant byte address 0x4 - core index']
  #allocation1 [shape = 'u32[144,128]{1,0:T(1,128)}', space=vmem, size = 0x12000, scoped, tag = 'internal scratch']
  %s0 = inlined_call_operand.vmem [shape: f32[72,16], index: 0, kind: input, shape index: {}]
  %s1 = inlined_call_operand.hbm [shape: f32[16,256], index: 1, kind: input, shape index: {}]
  %s2 = inlined_call_operand.vmem [shape: f32[1,256], index: 2, kind: input, shape index: {}]
  %s3 = inlined_call_operand.vmem [shape: bf16[64,256], index: 3, kind: input, shape index: {}]
  %s4 = inlined_call_operand.hbm [shape: bf16[64,128], index: 4, kind: input, shape index: {}]
  %s5 = inlined_call_operand.vmem [shape: f32[1,128], index: 5, kind: input, shape index: {}]
  %s6 = inlined_call_operand.hbm [shape: f32[8,128], index: 6, kind: output, shape index: {}]
  %s7 = sld [smem:[#allocation0]]
  $region42: #{tpu_custom_call.1} parent=0
    _
  %s9 = ssub.s32 1, %s7
  %s10 = scalar_select 0, %s9, %s7
  $region1: #{tpu_custom_call.1} parent=0
    #allocation2 [shape = 'u8[16384]{0}', space=vmem, size = 0x4000, scoped, tag = 'input window, operand 1, single buffered']
    #allocation3 [shape = 's32[1]{0}', space=sflag, size = 0x4, scoped, tag = 'scoped memory for tpu_custom_call.1']
    #allocation4 [shape = 's32[1]{0}', space=sflag, size = 0x4, scoped, tag = 'scoped memory for tpu_custom_call.1']
    #allocation5 [shape = 'u8[16384]{0}', space=vmem, size = 0x4000, scoped, tag = 'input window, operand 4, single buffered']
    #allocation6 [shape = 's32[1]{0}', space=sflag, size = 0x4, scoped, tag = 'scoped memory for tpu_custom_call.1']
    #allocation7 [shape = 'u8[4096]{0}', space=vmem, size = 0x1000, scoped, tag = 'output window, operand 0, single buffered']
    %11 = vsyncpa [#allocation3], 0
    %12 = vsyncpa [#allocation6], 0
    %13 = vsyncpa [#allocation4], 0
    // Predicated region
    $region2: #{tpu_custom_call.1} parent=1 // pred_check
      _
    $region3: #{tpu_custom_call.1} parent=1 // pred_check_branch
      %15 = sbr.rel (0) target = $region5
    $region4: #{tpu_custom_call.1} parent=1 // pred_region
      _
    $region5: #{tpu_custom_call.1} parent=1 // pred_fallthru
      _
    // Predicated region
    $region6: #{tpu_custom_call.1} parent=1 // pred_check
      _
    $region7: #{tpu_custom_call.1} parent=1 // pred_check_branch
      %17 = sbr.rel (0) target = $region9
    $region8: #{tpu_custom_call.1} parent=1 // pred_region
      %s19 = ssub.s32 512, 512
      %20 = vsyncadd [#allocation3], %s19
      %s21 = sshll.u32 [#allocation2], 4
      %s22 = int_to_ptr.vmem [resolvable:$true] %s21
      %27 = dma.hbm_to_vmem [thread:$0]  %s1, 512, %s22, [#allocation3], 256, 256, 16
    $region9: #{tpu_custom_call.1} parent=1 // pred_fallthru
      _
    // Predicated region
    $region10: #{tpu_custom_call.1} parent=1 // pred_check
      _
    $region11: #{tpu_custom_call.1} parent=1 // pred_check_branch
      %29 = sbr.rel (0) target = $region13
    $region12: #{tpu_custom_call.1} parent=1 // pred_region
      _
    $region13: #{tpu_custom_call.1} parent=1 // pred_fallthru
      _
    // Predicated region
    $region14: #{tpu_custom_call.1} parent=1 // pred_check
      _
    $region15: #{tpu_custom_call.1} parent=1 // pred_check_branch
      %31 = sbr.rel (0) target = $region17
    $region16: #{tpu_custom_call.1} parent=1 // pred_region
      _
    $region17: #{tpu_custom_call.1} parent=1 // pred_fallthru
      _
    // Predicated region
    $region18: #{tpu_custom_call.1} parent=1 // pred_check
      _
    $region19: #{tpu_custom_call.1} parent=1 // pred_check_branch
      %33 = sbr.rel (0) target = $region21
    $region20: #{tpu_custom_call.1} parent=1 // pred_region
      %s35 = ssub.s32 512, 512
      %36 = vsyncadd [#allocation6], %s35
      %s37 = sshll.u32 [#allocation5], 4
      %s38 = int_to_ptr.vmem [resolvable:$true] %s37
      %43 = dma.hbm_to_vmem [thread:$0]  %s4, 512, %s38, [#allocation6], 64, 64, 4
    $region21: #{tpu_custom_call.1} parent=1 // pred_fallthru
      _
    // Predicated region
    $region22: #{tpu_custom_call.1} parent=1 // pred_check
      _
    $region23: #{tpu_custom_call.1} parent=1 // pred_check_branch
      %45 = sbr.rel (0) target = $region25
    $region24: #{tpu_custom_call.1} parent=1 // pred_region
      _
    $region25: #{tpu_custom_call.1} parent=1 // pred_fallthru
      _
    // Predicated region
    $region26: #{tpu_custom_call.1} parent=1 // pred_check
      _
    $region27: #{tpu_custom_call.1} parent=1 // pred_check_branch
      %47 = sbr.rel (0) target = $region29
    $region28: #{tpu_custom_call.1} parent=1 // pred_region
      %48 = dma.done [#allocation3], 512
    $region29: #{tpu_custom_call.1} parent=1 // pred_fallthru
      _
    // Predicated region
    $region30: #{tpu_custom_call.1} parent=1 // pred_check
      _
    $region31: #{tpu_custom_call.1} parent=1 // pred_check_branch
      %50 = sbr.rel (0) target = $region33
    $region32: #{tpu_custom_call.1} parent=1 // pred_region
      %51 = dma.done [#allocation6], 512
    $region33: #{tpu_custom_call.1} parent=1 // pred_fallthru
      _
    %v53 = vld [vmem:[%s0] sm:$0xff]
    %v54 = vld [vmem:[%s0 + $0x8] sm:$0xff]
    %v55 = vld [vmem:[%s0 + $0x10] sm:$0xff]
    %v56 = vld [vmem:[%s0 + $0x18] sm:$0xff]
    %v57 = vld [vmem:[%s0 + $0x20] sm:$0xff]
    %v58 = vld [vmem:[%s0 + $0x28] sm:$0xff]
    %v59 = vld [vmem:[%s0 + $0x30] sm:$0xff]
    %v60 = vld [vmem:[%s0 + $0x38] sm:$0xff]
    %v61 = vld [vmem:[%s0 + $0x40] sm:$0xff]
    %v62 = vld [vmem:[#allocation2] sm:$0xff]
    %v63 = vld [vmem:[#allocation2 + $0x8] sm:$0xff]
    %v64 = vld [vmem:[#allocation2 + $0x10] sm:$0xff]
    %v65 = vld [vmem:[#allocation2 + $0x18] sm:$0xff]
    %v66 = vld [vmem:[%s2] sm:$0x3]
    %v68 = vlaneseq
    %v69 = vshrl.u32 %v68, 7
    %v70 = vsub.s32 0, %v69
    %v71 = vrot.slane %v66, %v70
    %v72 = vlaneseq
    %v73 = vshrl.u32 %v72, 7
    %v74 = vsub.s32 1, %v73
    %v75 = vrot.slane %v66, %v74
    %vm78 = vcmask 130048
    %v80 = vsel %vm78, %v53, 0
    %v83 = vsel %vm78, %v54, 0
    %v86 = vsel %vm78, %v55, 0
    %v89 = vsel %vm78, %v56, 0
    %v92 = vsel %vm78, %v57, 0
    %v95 = vsel %vm78, %v58, 0
    %v98 = vsel %vm78, %v59, 0
    %v101 = vsel %vm78, %v60, 0
    %v104 = vsel %vm78, %v61, 0
    %106 = vmatprep.subr.mxu0 0.0
    %107 = vmatpush1.msra.mxu0 0.0
    %108 = vmatprep.subr.mxu0 0.0
    %109 = vmatpush1.msra.mxu0 0.0
    %110 = vmatprep.subr.mxu0 0.0
    %111 = vmatpush1.msra.mxu0 0.0
    %112 = vmatprep.subr.mxu0 0.0
    %113 = vmatpush1.msra.mxu0 0.0
    %114 = vmatprep.subr.mxu0 0.0
    %115 = vmatpush1.msra.mxu0 0.0
    %116 = vmatprep.subr.mxu0 0.0
    %117 = vmatpush1.msra.mxu0 0.0
    %118 = vmatprep.subr.mxu0 0.0
    %119 = vmatpush1.msra.mxu0 0.0
    %120 = vmatprep.subr.mxu0 0.0
    %121 = vmatpush1.msra.mxu0 0.0
    %122 = vmatprep.subr.mxu0 0.0
    %123 = vmatpush1.msra.mxu0 0.0
    %124 = vmatprep.subr.mxu0 0.0
    %125 = vmatpush1.msra.mxu0 0.0
    %126 = vmatprep.subr.mxu0 0.0
    %127 = vmatpush1.msra.mxu0 0.0
    %128 = vmatprep.subr.mxu0 0.0
    %129 = vmatpush1.msra.mxu0 0.0
    %130 = vmatprep.subr.mxu0 0.0
    %131 = vmatpush1.msra.mxu0 0.0
    %132 = vmatprep.subr.mxu0 0.0
    %133 = vmatpush1.msra.mxu0 0.0
    %134 = vmatprep.subr.mxu0 %v65
    %135 = vmatpush1.msra.mxu0 %v64
    %136 = vmatprep.subr.mxu0 %v63
    %137 = vmatpush1.msra.mxu0 %v62
    %138 = vmatprep.subr.mxu0 0.0
    %139 = vmatpush2.msra.mxu0 0.0
    %140 = vmatprep.subr.mxu0 0.0
    %141 = vmatpush2.msra.mxu0 0.0
    %142 = vmatprep.subr.mxu0 0.0
    %143 = vmatpush2.msra.mxu0 0.0
    %144 = vmatprep.subr.mxu0 0.0
    %145 = vmatpush2.msra.mxu0 0.0
    %146 = vmatprep.subr.mxu0 0.0
    %147 = vmatpush2.msra.mxu0 0.0
    %148 = vmatprep.subr.mxu0 0.0
    %149 = vmatpush2.msra.mxu0 0.0
    %150 = vmatprep.subr.mxu0 0.0
    %151 = vmatpush2.msra.mxu0 0.0
    %152 = vmatprep.subr.mxu0 0.0
    %153 = vmatpush2.msra.mxu0 0.0
    %154 = vmatprep.subr.mxu0 0.0
    %155 = vmatpush2.msra.mxu0 0.0
    %156 = vmatprep.subr.mxu0 0.0
    %157 = vmatpush2.msra.mxu0 0.0
    %158 = vmatprep.subr.mxu0 0.0
    %159 = vmatpush2.msra.mxu0 0.0
    %160 = vmatprep.subr.mxu0 0.0
    %161 = vmatpush2.msra.mxu0 0.0
    %162 = vmatprep.subr.mxu0 0.0
    %163 = vmatpush2.msra.mxu0 0.0
    %164 = vmatprep.subr.mxu0 0.0
    %165 = vmatpush2.msra.mxu0 0.0
    %166 = vmatprep.subr.mxu0 0.0
    %167 = vmatpush2.msra.mxu0 0.0
    %168 = vmatprep.subr.mxu0 0.0
    %169 = vmatpush2.msra.mxu0 0.0
    %170 = vmatprep.mubr.f32.mxu0 0.0
    %171 = vmatmul.mubr.f32.gmra.mxu0 %v80
    %v172 = vpop.f32.mrf.mxu0
    %v173 = vadd.f32 %v71, %v172
    %v174 = vpop.f32.mrf.mxu0
    %v175 = vadd.f32 %v75, %v174
    %176 = vmatprep.mubr.f32.mxu0 0.0
    %177 = vmatmul.mubr.f32.gmra.mxu0 %v83
    %v178 = vpop.f32.mrf.mxu0
    %v179 = vadd.f32 %v71, %v178
    %v180 = vpop.f32.mrf.mxu0
    %v181 = vadd.f32 %v75, %v180
    %182 = vmatprep.mubr.f32.mxu0 0.0
    %183 = vmatmul.mubr.f32.gmra.mxu0 %v86
    %v184 = vpop.f32.mrf.mxu0
    %v185 = vadd.f32 %v71, %v184
    %v186 = vpop.f32.mrf.mxu0
    %v187 = vadd.f32 %v75, %v186
    %188 = vmatprep.mubr.f32.mxu0 0.0
    %189 = vmatmul.mubr.f32.gmra.mxu0 %v89
    %v190 = vpop.f32.mrf.mxu0
    %v191 = vadd.f32 %v71, %v190
    %v192 = vpop.f32.mrf.mxu0
    %v193 = vadd.f32 %v75, %v192
    %194 = vmatprep.mubr.f32.mxu0 0.0
    %195 = vmatmul.mubr.f32.gmra.mxu0 %v92
    %v196 = vpop.f32.mrf.mxu0
    %v197 = vadd.f32 %v71, %v196
    %v198 = vpop.f32.mrf.mxu0
    %v199 = vadd.f32 %v75, %v198
    %200 = vmatprep.mubr.f32.mxu0 0.0
    %201 = vmatmul.mubr.f32.gmra.mxu0 %v95
    %v202 = vpop.f32.mrf.mxu0
    %v203 = vadd.f32 %v71, %v202
    %v204 = vpop.f32.mrf.mxu0
    %v205 = vadd.f32 %v75, %v204
    %206 = vmatprep.mubr.f32.mxu0 0.0
    %207 = vmatmul.mubr.f32.gmra.mxu0 %v98
    %v208 = vpop.f32.mrf.mxu0
    %v209 = vadd.f32 %v71, %v208
    %v210 = vpop.f32.mrf.mxu0
    %v211 = vadd.f32 %v75, %v210
    %212 = vmatprep.mubr.f32.mxu0 0.0
    %213 = vmatmul.mubr.f32.gmra.mxu0 %v101
    %v214 = vpop.f32.mrf.mxu0
    %v215 = vadd.f32 %v71, %v214
    %v216 = vpop.f32.mrf.mxu0
    %v217 = vadd.f32 %v75, %v216
    %218 = vmatprep.mubr.f32.mxu0 0.0
    %219 = vmatmul.mubr.f32.gmra.mxu0 %v104
    %v220 = vpop.f32.mrf.mxu0
    %v221 = vadd.f32 %v71, %v220
    %v222 = vpop.f32.mrf.mxu0
    %v223 = vadd.f32 %v75, %v222
    %224 = vdwg.mxu0
    %v225 = vld [vmem:[%s3] sm:$0xff]
    %v226 = vld [vmem:[%s3 + $0x8] sm:$0xff]
    %v227 = vld [vmem:[%s3 + $0x10] sm:$0xff]
    %v228 = vld [vmem:[%s3 + $0x18] sm:$0xff]
    %v229 = vld [vmem:[%s3 + $0x20] sm:$0xff]
    %v230 = vld [vmem:[%s3 + $0x28] sm:$0xff]
    %v231 = vld [vmem:[%s3 + $0x30] sm:$0xff]
    %v232 = vld [vmem:[%s3 + $0x38] sm:$0xff]
    %v233 = vlaneseq
    %v234 = vand.u32 %v233, 127
    %vm235 = vcmp.lt.s32.totalorder %v234, 32
    %v236 = vsel %vm235, 1, 0
    %v237 = vcvt.s32.f32 %v236
    %v246 = vunpack.c.l.b16 %v225
    %v247 = vunpack.c.h.b16 %v225
    %v248 = vunpack.c.l.b16 %v226
    %v249 = vunpack.c.h.b16 %v226
    %v250 = vunpack.c.l.b16 %v227
    %v251 = vunpack.c.h.b16 %v227
    %v252 = vunpack.c.l.b16 %v228
    %v253 = vunpack.c.h.b16 %v228
    %v254 = vunpack.c.l.b16 %v229
    %v255 = vunpack.c.h.b16 %v229
    %v256 = vunpack.c.l.b16 %v230
    %v257 = vunpack.c.h.b16 %v230
    %v258 = vunpack.c.l.b16 %v231
    %v259 = vunpack.c.h.b16 %v231
    %v260 = vunpack.c.l.b16 %v232
    %v261 = vunpack.c.h.b16 %v232
    %v262 = vpack.c.b16 %v248, %v246
    %v263 = vpack.c.b16 %v249, %v247
    %v264 = vpack.c.b16 %v252, %v250
    %v265 = vpack.c.b16 %v253, %v251
    %v266 = vpack.c.b16 %v256, %v254
    %v267 = vpack.c.b16 %v257, %v255
    %v268 = vpack.c.b16 %v260, %v258
    %v269 = vpack.c.b16 %v261, %v259
    %vm278 = vcmask 523264
    %v280 = vsel %vm278, 0, 0
    %282 = vmatprep.subr.bf16.mxu0 0
    %283 = vmatpush1.bf16.msra.mxu0 0
    %284 = vmatprep.subr.bf16.mxu0 0
    %285 = vmatpush1.bf16.msra.mxu0 0
    %286 = vmatprep.subr.bf16.mxu0 0
    %287 = vmatpush1.bf16.msra.mxu0 0
    %288 = vmatprep.subr.bf16.mxu0 0
    %289 = vmatpush1.bf16.msra.mxu0 0
    %290 = vmatprep.subr.bf16.mxu0 %v269
    %291 = vmatpush1.bf16.msra.mxu0 %v268
    %292 = vmatprep.subr.bf16.mxu0 %v267
    %293 = vmatpush1.bf16.msra.mxu0 %v266
    %294 = vmatprep.subr.bf16.mxu0 %v265
    %295 = vmatpush1.bf16.msra.mxu0 %v264
    %296 = vmatprep.subr.bf16.mxu0 %v263
    %297 = vmatpush1.bf16.msra.mxu0 %v262
    %298 = vmatprep.subr.bf16.mxu0 0
    %299 = vmatpush2.bf16.msra.mxu0 0
    %300 = vmatprep.subr.bf16.mxu0 0
    %301 = vmatpush2.bf16.msra.mxu0 0
    %302 = vmatprep.subr.bf16.mxu0 0
    %303 = vmatpush2.bf16.msra.mxu0 0
    %304 = vmatprep.subr.bf16.mxu0 0
    %305 = vmatpush2.bf16.msra.mxu0 0
    %306 = vmatprep.subr.bf16.mxu0 0
    %307 = vmatpush2.bf16.msra.mxu0 0
    %308 = vmatprep.subr.bf16.mxu0 0
    %309 = vmatpush2.bf16.msra.mxu0 0
    %310 = vmatprep.subr.bf16.mxu0 0
    %311 = vmatpush2.bf16.msra.mxu0 0
    %312 = vmatprep.subr.bf16.mxu0 0
    %313 = vmatpush2.bf16.msra.mxu0 0
    %314 = vmatprep.mubr.bf16.mxu0 0
    %315 = vmatmul.mubr.bf16.gmra.mxu0 %v280
    %v316 = vpop.f32.mrf.mxu0
    %v317 = vadd.f32 0.0, %v316
    %v318 = vpop.f32.mrf.mxu0
    %v319 = vadd.f32 0.0, %v318
    %v320 = vpop.f32.mrf.mxu0
    %v321 = vpop.f32.mrf.mxu0
    %322 = vdwg.mxu0
    %v323 = vadd.f32 %v173, %v317
    %v324 = vadd.f32 %v175, %v319
    %v325 = vxor.u32 %v323, 2147483648
    %v326 = vxor.u32 %v324, 2147483648
    %v327 = vmul.f32 %v325, 1.442695
    %v328 = vpow.pop %v327
    %v329 = vmul.f32 %v326, 1.442695
    %v330 = vpow.pop %v329
    %v331 = vadd.f32 %v328, 1.0
    %v332 = vadd.f32 %v330, 1.0
    %v333 = vrcp.pop %v331
    %v334 = vmul.f32 1.0, %v333
    %v335 = vrcp.pop %v332
    %v336 = vmul.f32 1.0, %v335
    %v337 = vmul.f32 %v336, 2.0
    %v338 = vsub.f32 %v337, 1.0
    %v339 = vmul.f32 %v334, 0.0
    %v340 = vmul.f32 %v334, %v338
    %342 = vrot.lane.b32.xlu0 %v340, 64
    %v343 = vpop.permute.xlu0 %342
    %v345 = vadd.f32 %v339, %v343
    %v346 = vtanh.pop %v345
    %v347 = vmul.f32 %v336, %v346
    %349 = vrot.lane.b32.xlu0 %v237, 64
    %v350 = vpop.permute.xlu0 %349
    %v352 = vmul.f32 %v345, %v350
    %v353 = vmul.f32 %v347, %v350
    %v354 = vpack.c.bf16 %v353, %v353
    %356 = vrot.lane.b32.xlu0 %v354, 64
    %v357 = vpop.permute.xlu0 %356
    %v359 = vsel %vm278, %v357, 0
    %361 = vmatprep.subr.bf16.mxu0 0
    %362 = vmatpush1.bf16.msra.mxu0 0
    %363 = vmatprep.subr.bf16.mxu0 0
    %364 = vmatpush1.bf16.msra.mxu0 0
    %365 = vmatprep.subr.bf16.mxu0 0
    %366 = vmatpush1.bf16.msra.mxu0 0
    %367 = vmatprep.subr.bf16.mxu0 0
    %368 = vmatpush1.bf16.msra.mxu0 0
    %369 = vmatprep.subr.bf16.mxu0 %v269
    %370 = vmatpush1.bf16.msra.mxu0 %v268
    %371 = vmatprep.subr.bf16.mxu0 %v267
    %372 = vmatpush1.bf16.msra.mxu0 %v266
    %373 = vmatprep.subr.bf16.mxu0 %v265
    %374 = vmatpush1.bf16.msra.mxu0 %v264
    %375 = vmatprep.subr.bf16.mxu0 %v263
    %376 = vmatpush1.bf16.msra.mxu0 %v262
    %377 = vmatprep.subr.bf16.mxu0 0
    %378 = vmatpush2.bf16.msra.mxu0 0
    %379 = vmatprep.subr.bf16.mxu0 0
    %380 = vmatpush2.bf16.msra.mxu0 0
    %381 = vmatprep.subr.bf16.mxu0 0
    %382 = vmatpush2.bf16.msra.mxu0 0
    %383 = vmatprep.subr.bf16.mxu0 0
    %384 = vmatpush2.bf16.msra.mxu0 0
    %385 = vmatprep.subr.bf16.mxu0 0
    %386 = vmatpush2.bf16.msra.mxu0 0
    %387 = vmatprep.subr.bf16.mxu0 0
    %388 = vmatpush2.bf16.msra.mxu0 0
    %389 = vmatprep.subr.bf16.mxu0 0
    %390 = vmatpush2.bf16.msra.mxu0 0
    %391 = vmatprep.subr.bf16.mxu0 0
    %392 = vmatpush2.bf16.msra.mxu0 0
    %393 = vmatprep.mubr.bf16.mxu0 0
    %394 = vmatmul.mubr.bf16.gmra.mxu0 %v359
    %v395 = vpop.f32.mrf.mxu0
    %v396 = vadd.f32 0.0, %v395
    %v397 = vpop.f32.mrf.mxu0
    %v398 = vadd.f32 0.0, %v397
    %v399 = vpop.f32.mrf.mxu0
    %v400 = vpop.f32.mrf.mxu0
    %401 = vdwg.mxu0
    %v402 = vadd.f32 %v179, %v396
    %v403 = vadd.f32 %v181, %v398
    %v404 = vxor.u32 %v402, 2147483648
    %v405 = vxor.u32 %v403, 2147483648
    %v406 = vmul.f32 %v404, 1.442695
    %v407 = vpow.pop %v406
    %v408 = vmul.f32 %v405, 1.442695
    %v409 = vpow.pop %v408
    %v410 = vadd.f32 %v407, 1.0
    %v411 = vadd.f32 %v409, 1.0
    %v412 = vrcp.pop %v410
    %v413 = vmul.f32 1.0, %v412
    %v414 = vrcp.pop %v411
    %v415 = vmul.f32 1.0, %v414
    %v416 = vmul.f32 %v415, 2.0
    %v417 = vsub.f32 %v416, 1.0
    %v418 = vmul.f32 %v413, %v352
    %v419 = vmul.f32 %v413, %v417
    %421 = vrot.lane.b32.xlu0 %v419, 64
    %v422 = vpop.permute.xlu0 %421
    %v424 = vadd.f32 %v418, %v422
    %v425 = vtanh.pop %v424
    %v426 = vmul.f32 %v415, %v425
    %v427 = vpack.c.bf16 %v426, %v426
    %429 = vrot.lane.b32.xlu0 %v427, 64
    %v430 = vpop.permute.xlu0 %429
    %v432 = vsel %vm278, %v430, 0
    %434 = vmatprep.subr.bf16.mxu0 0
    %435 = vmatpush1.bf16.msra.mxu0 0
    %436 = vmatprep.subr.bf16.mxu0 0
    %437 = vmatpush1.bf16.msra.mxu0 0
    %438 = vmatprep.subr.bf16.mxu0 0
    %439 = vmatpush1.bf16.msra.mxu0 0
    %440 = vmatprep.subr.bf16.mxu0 0
    %441 = vmatpush1.bf16.msra.mxu0 0
    %442 = vmatprep.subr.bf16.mxu0 %v269
    %443 = vmatpush1.bf16.msra.mxu0 %v268
    %444 = vmatprep.subr.bf16.mxu0 %v267
    %445 = vmatpush1.bf16.msra.mxu0 %v266
    %446 = vmatprep.subr.bf16.mxu0 %v265
    %447 = vmatpush1.bf16.msra.mxu0 %v264
    %448 = vmatprep.subr.bf16.mxu0 %v263
    %449 = vmatpush1.bf16.msra.mxu0 %v262
    %450 = vmatprep.subr.bf16.mxu0 0
    %451 = vmatpush2.bf16.msra.mxu0 0
    %452 = vmatprep.subr.bf16.mxu0 0
    %453 = vmatpush2.bf16.msra.mxu0 0
    %454 = vmatprep.subr.bf16.mxu0 0
    %455 = vmatpush2.bf16.msra.mxu0 0
    %456 = vmatprep.subr.bf16.mxu0 0
    %457 = vmatpush2.bf16.msra.mxu0 0
    %458 = vmatprep.subr.bf16.mxu0 0
    %459 = vmatpush2.bf16.msra.mxu0 0
    %460 = vmatprep.subr.bf16.mxu0 0
    %461 = vmatpush2.bf16.msra.mxu0 0
    %462 = vmatprep.subr.bf16.mxu0 0
    %463 = vmatpush2.bf16.msra.mxu0 0
    %464 = vmatprep.subr.bf16.mxu0 0
    %465 = vmatpush2.bf16.msra.mxu0 0
    %466 = vmatprep.mubr.bf16.mxu0 0
    %467 = vmatmul.mubr.bf16.gmra.mxu0 %v432
    %v468 = vpop.f32.mrf.mxu0
    %v469 = vadd.f32 0.0, %v468
    %v470 = vpop.f32.mrf.mxu0
    %v471 = vadd.f32 0.0, %v470
    %v472 = vpop.f32.mrf.mxu0
    %v473 = vpop.f32.mrf.mxu0
    %474 = vdwg.mxu0
    %v475 = vadd.f32 %v185, %v469
    %v476 = vadd.f32 %v187, %v471
    %v477 = vxor.u32 %v475, 2147483648
    %v478 = vxor.u32 %v476, 2147483648
    %v479 = vmul.f32 %v477, 1.442695
    %v480 = vpow.pop %v479
    %v481 = vmul.f32 %v478, 1.442695
    %v482 = vpow.pop %v481
    %v483 = vadd.f32 %v480, 1.0
    %v484 = vadd.f32 %v482, 1.0
    %v485 = vrcp.pop %v483
    %v486 = vmul.f32 1.0, %v485
    %v487 = vrcp.pop %v484
    %v488 = vmul.f32 1.0, %v487
    %v489 = vmul.f32 %v488, 2.0
    %v490 = vsub.f32 %v489, 1.0
    %v491 = vmul.f32 %v486, %v424
    %v492 = vmul.f32 %v486, %v490
    %494 = vrot.lane.b32.xlu0 %v492, 64
    %v495 = vpop.permute.xlu0 %494
    %v497 = vadd.f32 %v491, %v495
    %v498 = vtanh.pop %v497
    %v499 = vmul.f32 %v488, %v498
    %v500 = vpack.c.bf16 %v499, %v499
    %502 = vrot.lane.b32.xlu0 %v500, 64
    %v503 = vpop.permute.xlu0 %502
    %v505 = vsel %vm278, %v503, 0
    %507 = vmatprep.subr.bf16.mxu0 0
    %508 = vmatpush1.bf16.msra.mxu0 0
    %509 = vmatprep.subr.bf16.mxu0 0
    %510 = vmatpush1.bf16.msra.mxu0 0
    %511 = vmatprep.subr.bf16.mxu0 0
    %512 = vmatpush1.bf16.msra.mxu0 0
    %513 = vmatprep.subr.bf16.mxu0 0
    %514 = vmatpush1.bf16.msra.mxu0 0
    %515 = vmatprep.subr.bf16.mxu0 %v269
    %516 = vmatpush1.bf16.msra.mxu0 %v268
    %517 = vmatprep.subr.bf16.mxu0 %v267
    %518 = vmatpush1.bf16.msra.mxu0 %v266
    %519 = vmatprep.subr.bf16.mxu0 %v265
    %520 = vmatpush1.bf16.msra.mxu0 %v264
    %521 = vmatprep.subr.bf16.mxu0 %v263
    %522 = vmatpush1.bf16.msra.mxu0 %v262
    %523 = vmatprep.subr.bf16.mxu0 0
    %524 = vmatpush2.bf16.msra.mxu0 0
    %525 = vmatprep.subr.bf16.mxu0 0
    %526 = vmatpush2.bf16.msra.mxu0 0
    %527 = vmatprep.subr.bf16.mxu0 0
    %528 = vmatpush2.bf16.msra.mxu0 0
    %529 = vmatprep.subr.bf16.mxu0 0
    %530 = vmatpush2.bf16.msra.mxu0 0
    %531 = vmatprep.subr.bf16.mxu0 0
    %532 = vmatpush2.bf16.msra.mxu0 0
    %533 = vmatprep.subr.bf16.mxu0 0
    %534 = vmatpush2.bf16.msra.mxu0 0
    %535 = vmatprep.subr.bf16.mxu0 0
    %536 = vmatpush2.bf16.msra.mxu0 0
    %537 = vmatprep.subr.bf16.mxu0 0
    %538 = vmatpush2.bf16.msra.mxu0 0
    %539 = vmatprep.mubr.bf16.mxu0 0
    %540 = vmatmul.mubr.bf16.gmra.mxu0 %v505
    %v541 = vpop.f32.mrf.mxu0
    %v542 = vadd.f32 0.0, %v541
    %v543 = vpop.f32.mrf.mxu0
    %v544 = vadd.f32 0.0, %v543
    %v545 = vpop.f32.mrf.mxu0
    %v546 = vpop.f32.mrf.mxu0
    %547 = vdwg.mxu0
    %v548 = vadd.f32 %v191, %v542
    %v549 = vadd.f32 %v193, %v544
    %v550 = vxor.u32 %v548, 2147483648
    %v551 = vxor.u32 %v549, 2147483648
    %v552 = vmul.f32 %v550, 1.442695
    %v553 = vpow.pop %v552
    %v554 = vmul.f32 %v551, 1.442695
    %v555 = vpow.pop %v554
    %v556 = vadd.f32 %v553, 1.0
    %v557 = vadd.f32 %v555, 1.0
    %v558 = vrcp.pop %v556
    %v559 = vmul.f32 1.0, %v558
    %v560 = vrcp.pop %v557
    %v561 = vmul.f32 1.0, %v560
    %v562 = vmul.f32 %v561, 2.0
    %v563 = vsub.f32 %v562, 1.0
    %v564 = vmul.f32 %v559, %v497
    %v565 = vmul.f32 %v559, %v563
    %567 = vrot.lane.b32.xlu0 %v565, 64
    %v568 = vpop.permute.xlu0 %567
    %v570 = vadd.f32 %v564, %v568
    %v571 = vtanh.pop %v570
    %v572 = vmul.f32 %v561, %v571
    %v573 = vpack.c.bf16 %v572, %v572
    %575 = vrot.lane.b32.xlu0 %v573, 64
    %v576 = vpop.permute.xlu0 %575
    %v578 = vsel %vm278, %v576, 0
    %580 = vmatprep.subr.bf16.mxu0 0
    %581 = vmatpush1.bf16.msra.mxu0 0
    %582 = vmatprep.subr.bf16.mxu0 0
    %583 = vmatpush1.bf16.msra.mxu0 0
    %584 = vmatprep.subr.bf16.mxu0 0
    %585 = vmatpush1.bf16.msra.mxu0 0
    %586 = vmatprep.subr.bf16.mxu0 0
    %587 = vmatpush1.bf16.msra.mxu0 0
    %588 = vmatprep.subr.bf16.mxu0 %v269
    %589 = vmatpush1.bf16.msra.mxu0 %v268
    %590 = vmatprep.subr.bf16.mxu0 %v267
    %591 = vmatpush1.bf16.msra.mxu0 %v266
    %592 = vmatprep.subr.bf16.mxu0 %v265
    %593 = vmatpush1.bf16.msra.mxu0 %v264
    %594 = vmatprep.subr.bf16.mxu0 %v263
    %595 = vmatpush1.bf16.msra.mxu0 %v262
    %596 = vmatprep.subr.bf16.mxu0 0
    %597 = vmatpush2.bf16.msra.mxu0 0
    %598 = vmatprep.subr.bf16.mxu0 0
    %599 = vmatpush2.bf16.msra.mxu0 0
    %600 = vmatprep.subr.bf16.mxu0 0
    %601 = vmatpush2.bf16.msra.mxu0 0
    %602 = vmatprep.subr.bf16.mxu0 0
    %603 = vmatpush2.bf16.msra.mxu0 0
    %604 = vmatprep.subr.bf16.mxu0 0
    %605 = vmatpush2.bf16.msra.mxu0 0
    %606 = vmatprep.subr.bf16.mxu0 0
    %607 = vmatpush2.bf16.msra.mxu0 0
    %608 = vmatprep.subr.bf16.mxu0 0
    %609 = vmatpush2.bf16.msra.mxu0 0
    %610 = vmatprep.subr.bf16.mxu0 0
    %611 = vmatpush2.bf16.msra.mxu0 0
    %612 = vmatprep.mubr.bf16.mxu0 0
    %613 = vmatmul.mubr.bf16.gmra.mxu0 %v578
    %v614 = vpop.f32.mrf.mxu0
    %v615 = vadd.f32 0.0, %v614
    %v616 = vpop.f32.mrf.mxu0
    %v617 = vadd.f32 0.0, %v616
    %v618 = vpop.f32.mrf.mxu0
    %v619 = vpop.f32.mrf.mxu0
    %620 = vdwg.mxu0
    %v621 = vadd.f32 %v197, %v615
    %v622 = vadd.f32 %v199, %v617
    %v623 = vxor.u32 %v621, 2147483648
    %v624 = vxor.u32 %v622, 2147483648
    %v625 = vmul.f32 %v623, 1.442695
    %v626 = vpow.pop %v625
    %v627 = vmul.f32 %v624, 1.442695
    %v628 = vpow.pop %v627
    %v629 = vadd.f32 %v626, 1.0
    %v630 = vadd.f32 %v628, 1.0
    %v631 = vrcp.pop %v629
    %v632 = vmul.f32 1.0, %v631
    %v633 = vrcp.pop %v630
    %v634 = vmul.f32 1.0, %v633
    %v635 = vmul.f32 %v634, 2.0
    %v636 = vsub.f32 %v635, 1.0
    %v637 = vmul.f32 %v632, %v570
    %v638 = vmul.f32 %v632, %v636
    %640 = vrot.lane.b32.xlu0 %v638, 64
    %v641 = vpop.permute.xlu0 %640
    %v643 = vadd.f32 %v637, %v641
    %v644 = vtanh.pop %v643
    %v645 = vmul.f32 %v634, %v644
    %v646 = vpack.c.bf16 %v645, %v645
    %648 = vrot.lane.b32.xlu0 %v646, 64
    %v649 = vpop.permute.xlu0 %648
    %v651 = vsel %vm278, %v649, 0
    %653 = vmatprep.subr.bf16.mxu0 0
    %654 = vmatpush1.bf16.msra.mxu0 0
    %655 = vmatprep.subr.bf16.mxu0 0
    %656 = vmatpush1.bf16.msra.mxu0 0
    %657 = vmatprep.subr.bf16.mxu0 0
    %658 = vmatpush1.bf16.msra.mxu0 0
    %659 = vmatprep.subr.bf16.mxu0 0
    %660 = vmatpush1.bf16.msra.mxu0 0
    %661 = vmatprep.subr.bf16.mxu0 %v269
    %662 = vmatpush1.bf16.msra.mxu0 %v268
    %663 = vmatprep.subr.bf16.mxu0 %v267
    %664 = vmatpush1.bf16.msra.mxu0 %v266
    %665 = vmatprep.subr.bf16.mxu0 %v265
    %666 = vmatpush1.bf16.msra.mxu0 %v264
    %667 = vmatprep.subr.bf16.mxu0 %v263
    %668 = vmatpush1.bf16.msra.mxu0 %v262
    %669 = vmatprep.subr.bf16.mxu0 0
    %670 = vmatpush2.bf16.msra.mxu0 0
    %671 = vmatprep.subr.bf16.mxu0 0
    %672 = vmatpush2.bf16.msra.mxu0 0
    %673 = vmatprep.subr.bf16.mxu0 0
    %674 = vmatpush2.bf16.msra.mxu0 0
    %675 = vmatprep.subr.bf16.mxu0 0
    %676 = vmatpush2.bf16.msra.mxu0 0
    %677 = vmatprep.subr.bf16.mxu0 0
    %678 = vmatpush2.bf16.msra.mxu0 0
    %679 = vmatprep.subr.bf16.mxu0 0
    %680 = vmatpush2.bf16.msra.mxu0 0
    %681 = vmatprep.subr.bf16.mxu0 0
    %682 = vmatpush2.bf16.msra.mxu0 0
    %683 = vmatprep.subr.bf16.mxu0 0
    %684 = vmatpush2.bf16.msra.mxu0 0
    %685 = vmatprep.mubr.bf16.mxu0 0
    %686 = vmatmul.mubr.bf16.gmra.mxu0 %v651
    %v687 = vpop.f32.mrf.mxu0
    %v688 = vadd.f32 0.0, %v687
    %v689 = vpop.f32.mrf.mxu0
    %v690 = vadd.f32 0.0, %v689
    %v691 = vpop.f32.mrf.mxu0
    %v692 = vpop.f32.mrf.mxu0
    %693 = vdwg.mxu0
    %v694 = vadd.f32 %v203, %v688
    %v695 = vadd.f32 %v205, %v690
    %v696 = vxor.u32 %v694, 2147483648
    %v697 = vxor.u32 %v695, 2147483648
    %v698 = vmul.f32 %v696, 1.442695
    %v699 = vpow.pop %v698
    %v700 = vmul.f32 %v697, 1.442695
    %v701 = vpow.pop %v700
    %v702 = vadd.f32 %v699, 1.0
    %v703 = vadd.f32 %v701, 1.0
    %v704 = vrcp.pop %v702
    %v705 = vmul.f32 1.0, %v704
    %v706 = vrcp.pop %v703
    %v707 = vmul.f32 1.0, %v706
    %v708 = vmul.f32 %v707, 2.0
    %v709 = vsub.f32 %v708, 1.0
    %v710 = vmul.f32 %v705, %v643
    %v711 = vmul.f32 %v705, %v709
    %713 = vrot.lane.b32.xlu0 %v711, 64
    %v714 = vpop.permute.xlu0 %713
    %v716 = vadd.f32 %v710, %v714
    %v717 = vtanh.pop %v716
    %v718 = vmul.f32 %v707, %v717
    %v719 = vpack.c.bf16 %v718, %v718
    %721 = vrot.lane.b32.xlu0 %v719, 64
    %v722 = vpop.permute.xlu0 %721
    %v724 = vsel %vm278, %v722, 0
    %726 = vmatprep.subr.bf16.mxu0 0
    %727 = vmatpush1.bf16.msra.mxu0 0
    %728 = vmatprep.subr.bf16.mxu0 0
    %729 = vmatpush1.bf16.msra.mxu0 0
    %730 = vmatprep.subr.bf16.mxu0 0
    %731 = vmatpush1.bf16.msra.mxu0 0
    %732 = vmatprep.subr.bf16.mxu0 0
    %733 = vmatpush1.bf16.msra.mxu0 0
    %734 = vmatprep.subr.bf16.mxu0 %v269
    %735 = vmatpush1.bf16.msra.mxu0 %v268
    %736 = vmatprep.subr.bf16.mxu0 %v267
    %737 = vmatpush1.bf16.msra.mxu0 %v266
    %738 = vmatprep.subr.bf16.mxu0 %v265
    %739 = vmatpush1.bf16.msra.mxu0 %v264
    %740 = vmatprep.subr.bf16.mxu0 %v263
    %741 = vmatpush1.bf16.msra.mxu0 %v262
    %742 = vmatprep.subr.bf16.mxu0 0
    %743 = vmatpush2.bf16.msra.mxu0 0
    %744 = vmatprep.subr.bf16.mxu0 0
    %745 = vmatpush2.bf16.msra.mxu0 0
    %746 = vmatprep.subr.bf16.mxu0 0
    %747 = vmatpush2.bf16.msra.mxu0 0
    %748 = vmatprep.subr.bf16.mxu0 0
    %749 = vmatpush2.bf16.msra.mxu0 0
    %750 = vmatprep.subr.bf16.mxu0 0
    %751 = vmatpush2.bf16.msra.mxu0 0
    %752 = vmatprep.subr.bf16.mxu0 0
    %753 = vmatpush2.bf16.msra.mxu0 0
    %754 = vmatprep.subr.bf16.mxu0 0
    %755 = vmatpush2.bf16.msra.mxu0 0
    %756 = vmatprep.subr.bf16.mxu0 0
    %757 = vmatpush2.bf16.msra.mxu0 0
    %758 = vmatprep.mubr.bf16.mxu0 0
    %759 = vmatmul.mubr.bf16.gmra.mxu0 %v724
    %v760 = vpop.f32.mrf.mxu0
    %v761 = vadd.f32 0.0, %v760
    %v762 = vpop.f32.mrf.mxu0
    %v763 = vadd.f32 0.0, %v762
    %v764 = vpop.f32.mrf.mxu0
    %v765 = vpop.f32.mrf.mxu0
    %766 = vdwg.mxu0
    %v767 = vadd.f32 %v209, %v761
    %v768 = vadd.f32 %v211, %v763
    %v769 = vxor.u32 %v767, 2147483648
    %v770 = vxor.u32 %v768, 2147483648
    %v771 = vmul.f32 %v769, 1.442695
    %v772 = vpow.pop %v771
    %v773 = vmul.f32 %v770, 1.442695
    %v774 = vpow.pop %v773
    %v775 = vadd.f32 %v772, 1.0
    %v776 = vadd.f32 %v774, 1.0
    %v777 = vrcp.pop %v775
    %v778 = vmul.f32 1.0, %v777
    %v779 = vrcp.pop %v776
    %v780 = vmul.f32 1.0, %v779
    %v781 = vmul.f32 %v780, 2.0
    %v782 = vsub.f32 %v781, 1.0
    %v783 = vmul.f32 %v778, %v716
    %v784 = vmul.f32 %v778, %v782
    %786 = vrot.lane.b32.xlu0 %v784, 64
    %v787 = vpop.permute.xlu0 %786
    %v789 = vadd.f32 %v783, %v787
    %v790 = vtanh.pop %v789
    %v791 = vmul.f32 %v780, %v790
    %v792 = vpack.c.bf16 %v791, %v791
    %794 = vrot.lane.b32.xlu0 %v792, 64
    %v795 = vpop.permute.xlu0 %794
    %v797 = vsel %vm278, %v795, 0
    %799 = vmatprep.subr.bf16.mxu0 0
    %800 = vmatpush1.bf16.msra.mxu0 0
    %801 = vmatprep.subr.bf16.mxu0 0
    %802 = vmatpush1.bf16.msra.mxu0 0
    %803 = vmatprep.subr.bf16.mxu0 0
    %804 = vmatpush1.bf16.msra.mxu0 0
    %805 = vmatprep.subr.bf16.mxu0 0
    %806 = vmatpush1.bf16.msra.mxu0 0
    %807 = vmatprep.subr.bf16.mxu0 %v269
    %808 = vmatpush1.bf16.msra.mxu0 %v268
    %809 = vmatprep.subr.bf16.mxu0 %v267
    %810 = vmatpush1.bf16.msra.mxu0 %v266
    %811 = vmatprep.subr.bf16.mxu0 %v265
    %812 = vmatpush1.bf16.msra.mxu0 %v264
    %813 = vmatprep.subr.bf16.mxu0 %v263
    %814 = vmatpush1.bf16.msra.mxu0 %v262
    %815 = vmatprep.subr.bf16.mxu0 0
    %816 = vmatpush2.bf16.msra.mxu0 0
    %817 = vmatprep.subr.bf16.mxu0 0
    %818 = vmatpush2.bf16.msra.mxu0 0
    %819 = vmatprep.subr.bf16.mxu0 0
    %820 = vmatpush2.bf16.msra.mxu0 0
    %821 = vmatprep.subr.bf16.mxu0 0
    %822 = vmatpush2.bf16.msra.mxu0 0
    %823 = vmatprep.subr.bf16.mxu0 0
    %824 = vmatpush2.bf16.msra.mxu0 0
    %825 = vmatprep.subr.bf16.mxu0 0
    %826 = vmatpush2.bf16.msra.mxu0 0
    %827 = vmatprep.subr.bf16.mxu0 0
    %828 = vmatpush2.bf16.msra.mxu0 0
    %829 = vmatprep.subr.bf16.mxu0 0
    %830 = vmatpush2.bf16.msra.mxu0 0
    %831 = vmatprep.mubr.bf16.mxu0 0
    %832 = vmatmul.mubr.bf16.gmra.mxu0 %v797
    %v833 = vpop.f32.mrf.mxu0
    %v834 = vadd.f32 0.0, %v833
    %v835 = vpop.f32.mrf.mxu0
    %v836 = vadd.f32 0.0, %v835
    %v837 = vpop.f32.mrf.mxu0
    %v838 = vpop.f32.mrf.mxu0
    %839 = vdwg.mxu0
    %v840 = vadd.f32 %v215, %v834
    %v841 = vadd.f32 %v217, %v836
    %v842 = vxor.u32 %v840, 2147483648
    %v843 = vxor.u32 %v841, 2147483648
    %v844 = vmul.f32 %v842, 1.442695
    %v845 = vpow.pop %v844
    %v846 = vmul.f32 %v843, 1.442695
    %v847 = vpow.pop %v846
    %v848 = vadd.f32 %v845, 1.0
    %v849 = vadd.f32 %v847, 1.0
    %v850 = vrcp.pop %v848
    %v851 = vmul.f32 1.0, %v850
    %v852 = vrcp.pop %v849
    %v853 = vmul.f32 1.0, %v852
    %v854 = vmul.f32 %v853, 2.0
    %v855 = vsub.f32 %v854, 1.0
    %v856 = vmul.f32 %v851, %v789
    %v857 = vmul.f32 %v851, %v855
    %859 = vrot.lane.b32.xlu0 %v857, 64
    %v860 = vpop.permute.xlu0 %859
    %v862 = vadd.f32 %v856, %v860
    %v863 = vtanh.pop %v862
    %v864 = vmul.f32 %v853, %v863
    %v865 = vpack.c.bf16 %v864, %v864
    %867 = vrot.lane.b32.xlu0 %v865, 64
    %v868 = vpop.permute.xlu0 %867
    %v870 = vsel %vm278, %v868, 0
    %872 = vmatprep.subr.bf16.mxu0 0
    %873 = vmatpush1.bf16.msra.mxu0 0
    %874 = vmatprep.subr.bf16.mxu0 0
    %875 = vmatpush1.bf16.msra.mxu0 0
    %876 = vmatprep.subr.bf16.mxu0 0
    %877 = vmatpush1.bf16.msra.mxu0 0
    %878 = vmatprep.subr.bf16.mxu0 0
    %879 = vmatpush1.bf16.msra.mxu0 0
    %880 = vmatprep.subr.bf16.mxu0 %v269
    %881 = vmatpush1.bf16.msra.mxu0 %v268
    %882 = vmatprep.subr.bf16.mxu0 %v267
    %883 = vmatpush1.bf16.msra.mxu0 %v266
    %884 = vmatprep.subr.bf16.mxu0 %v265
    %885 = vmatpush1.bf16.msra.mxu0 %v264
    %886 = vmatprep.subr.bf16.mxu0 %v263
    %887 = vmatpush1.bf16.msra.mxu0 %v262
    %888 = vmatprep.subr.bf16.mxu0 0
    %889 = vmatpush2.bf16.msra.mxu0 0
    %890 = vmatprep.subr.bf16.mxu0 0
    %891 = vmatpush2.bf16.msra.mxu0 0
    %892 = vmatprep.subr.bf16.mxu0 0
    %893 = vmatpush2.bf16.msra.mxu0 0
    %894 = vmatprep.subr.bf16.mxu0 0
    %895 = vmatpush2.bf16.msra.mxu0 0
    %896 = vmatprep.subr.bf16.mxu0 0
    %897 = vmatpush2.bf16.msra.mxu0 0
    %898 = vmatprep.subr.bf16.mxu0 0
    %899 = vmatpush2.bf16.msra.mxu0 0
    %900 = vmatprep.subr.bf16.mxu0 0
    %901 = vmatpush2.bf16.msra.mxu0 0
    %902 = vmatprep.subr.bf16.mxu0 0
    %903 = vmatpush2.bf16.msra.mxu0 0
    %904 = vmatprep.mubr.bf16.mxu0 0
    %905 = vmatmul.mubr.bf16.gmra.mxu0 %v870
    %v906 = vpop.f32.mrf.mxu0
    %v907 = vadd.f32 0.0, %v906
    %v908 = vpop.f32.mrf.mxu0
    %v909 = vadd.f32 0.0, %v908
    %v910 = vpop.f32.mrf.mxu0
    %v911 = vpop.f32.mrf.mxu0
    %912 = vdwg.mxu0
    %v913 = vadd.f32 %v221, %v907
    %v914 = vadd.f32 %v223, %v909
    %v915 = vxor.u32 %v913, 2147483648
    %v916 = vxor.u32 %v914, 2147483648
    %v917 = vmul.f32 %v915, 1.442695
    %v918 = vpow.pop %v917
    %v919 = vmul.f32 %v916, 1.442695
    %v920 = vpow.pop %v919
    %v921 = vadd.f32 %v918, 1.0
    %v922 = vadd.f32 %v920, 1.0
    %v923 = vrcp.pop %v921
    %v924 = vmul.f32 1.0, %v923
    %v925 = vrcp.pop %v922
    %v926 = vmul.f32 1.0, %v925
    %v927 = vmul.f32 %v926, 2.0
    %v928 = vsub.f32 %v927, 1.0
    %v929 = vmul.f32 %v924, %v862
    %v930 = vmul.f32 %v924, %v928
    %932 = vrot.lane.b32.xlu0 %v930, 64
    %v933 = vpop.permute.xlu0 %932
    %v935 = vadd.f32 %v929, %v933
    %v936 = vtanh.pop %v935
    %v937 = vmul.f32 %v926, %v936
    %v938 = vpack.c.bf16 %v937, %v937
    %v939 = vld [vmem:[#allocation5] sm:$0xf]
    %v940 = vld [vmem:[#allocation5 + $0x4] sm:$0xf]
    %v941 = vld [vmem:[#allocation5 + $0x8] sm:$0xf]
    %v942 = vld [vmem:[#allocation5 + $0xc] sm:$0xf]
    %v943 = vld [vmem:[#allocation5 + $0x10] sm:$0xf]
    %v944 = vld [vmem:[#allocation5 + $0x14] sm:$0xf]
    %v945 = vld [vmem:[#allocation5 + $0x18] sm:$0xf]
    %v946 = vld [vmem:[#allocation5 + $0x1c] sm:$0xf]
    %v947 = vld [vmem:[%s5] sm:$0x1]
    %v949 = vlaneseq
    %v950 = vshrl.u32 %v949, 7
    %v951 = vsub.s32 0, %v950
    %v952 = vrot.slane %v947, %v951
    %955 = vrot.lane.b32.xlu0 %v938, 64
    %v956 = vpop.permute.xlu0 %955
    %v965 = vunpack.c.l.b16 %v939
    %v966 = vunpack.c.l.b16 %v940
    %v967 = vunpack.c.l.b16 %v941
    %v968 = vunpack.c.l.b16 %v942
    %v969 = vunpack.c.l.b16 %v943
    %v970 = vunpack.c.l.b16 %v944
    %v971 = vunpack.c.l.b16 %v945
    %v972 = vunpack.c.l.b16 %v946
    %v973 = vpack.c.b16 %v966, %v965
    %v974 = vpack.c.b16 %v968, %v967
    %v975 = vpack.c.b16 %v970, %v969
    %v976 = vpack.c.b16 %v972, %v971
    %v982 = vsel %vm278, %v956, 0
    %984 = vmatprep.subr.bf16.mxu0 0
    %985 = vmatpush1.bf16.msra.mxu0 0
    %986 = vmatprep.subr.bf16.mxu0 0
    %987 = vmatpush1.bf16.msra.mxu0 0
    %988 = vmatprep.subr.bf16.mxu0 0
    %989 = vmatpush1.bf16.msra.mxu0 0
    %990 = vmatprep.subr.bf16.mxu0 0
    %991 = vmatpush1.bf16.msra.mxu0 0
    %992 = vmatprep.subr.bf16.mxu0 0
    %993 = vmatpush1.bf16.msra.mxu0 %v976
    %994 = vmatprep.subr.bf16.mxu0 0
    %995 = vmatpush1.bf16.msra.mxu0 %v975
    %996 = vmatprep.subr.bf16.mxu0 0
    %997 = vmatpush1.bf16.msra.mxu0 %v974
    %998 = vmatprep.subr.bf16.mxu0 0
    %999 = vmatpush1.bf16.msra.mxu0 %v973
    %1000 = vmatprep.subr.bf16.mxu0 0
    %1001 = vmatpush2.bf16.msra.mxu0 0
    %1002 = vmatprep.subr.bf16.mxu0 0
    %1003 = vmatpush2.bf16.msra.mxu0 0
    %1004 = vmatprep.subr.bf16.mxu0 0
    %1005 = vmatpush2.bf16.msra.mxu0 0
    %1006 = vmatprep.subr.bf16.mxu0 0
    %1007 = vmatpush2.bf16.msra.mxu0 0
    %1008 = vmatprep.subr.bf16.mxu0 0
    %1009 = vmatpush2.bf16.msra.mxu0 0
    %1010 = vmatprep.subr.bf16.mxu0 0
    %1011 = vmatpush2.bf16.msra.mxu0 0
    %1012 = vmatprep.subr.bf16.mxu0 0
    %1013 = vmatpush2.bf16.msra.mxu0 0
    %1014 = vmatprep.subr.bf16.mxu0 0
    %1015 = vmatpush2.bf16.msra.mxu0 0
    %1016 = vmatprep.mubr.bf16.mxu0 0
    %1017 = vmatmul.mubr.bf16.gmra.mxu0 %v982
    %v1018 = vpop.f32.mrf.mxu0
    %v1019 = vadd.f32 %v952, %v1018
    %v1020 = vpop.f32.mrf.mxu0
    %v1021 = vpop.f32.mrf.mxu0
    %v1022 = vpop.f32.mrf.mxu0
    %1023 = vdwg.mxu0
    %1024 = vst [vmem:[#allocation7] sm:$0xff] %v1019
    // Predicated region
    $region34: #{tpu_custom_call.1} parent=1 // pred_check
      _
    $region35: #{tpu_custom_call.1} parent=1 // pred_check_branch
      %1026 = sbr.rel (0) target = $region37
    $region36: #{tpu_custom_call.1} parent=1 // pred_region
      %s1028 = ssub.s32 128, 128
      %1029 = vsyncadd [#allocation4], %s1028
      %s1031 = sshll.u32 [#allocation7], 4
      %s1032 = int_to_ptr.vmem [resolvable:$true] %s1031
      %1034 = dma.vmem_to_hbm [thread:$0]  %s1032, 128, %s6, [#allocation4]
    $region37: #{tpu_custom_call.1} parent=1 // pred_fallthru
      _
    // Predicated region
    $region38: #{tpu_custom_call.1} parent=1 // pred_check
      _
    $region39: #{tpu_custom_call.1} parent=1 // pred_check_branch
      %1036 = sbr.rel (0) target = $region41
    $region40: #{tpu_custom_call.1} parent=1 // pred_region
      %1037 = dma.done [#allocation4], 128
    $region41: #{tpu_custom_call.1} parent=1 // pred_fallthru
      _
    %1038 = vsyncpa [#allocation3], 1
    %1039 = vsyncpa [#allocation6], 1
    %1040 = vsyncpa [#allocation4], 1

</llo_original>
